<compile_context>
chip_gen: v7x
topology: tpu7x:2x2x1
jax: 0.10.0
libtpu: 0.0.40
codegen_flags: <defaults>
</compile_context>

<pallas_src>
import functools
import math

import numpy as np
import jax
import jax.numpy as jnp
from jax import lax
from jax.experimental import pallas as pl
from jax.experimental.pallas import tpu as pltpu


def _round_up(a: int, b: int) -> int:
    return -(-a // b) * b


def _up_matrix(n_in: int, k: int) -> np.ndarray:
    """0/1 matrix A, shape (n_out, n_in), s.t. A @ v == conv_transpose1d(v, ones(k), stride=2)."""
    n_out = (n_in - 1) * 2 + k
    o = np.arange(n_out)[:, None]
    i = np.arange(n_in)[None, :]
    d = o - 2 * i
    return ((d >= 0) & (d < k)).astype(np.float64)


def _chip_config():
    kind = ""
    try:
        kind = jax.devices()[0].device_kind.lower()
    except Exception:
        pass
    if "7" in kind:
        # v7x: 2 TensorCores share the chip, 64 MiB physical VMEM (32 MiB scoped default).
        return {"budget": 12 << 20, "vmem_cap": 32 << 20, "multi_tc": True}
    # v5e / v6e (and default): single TensorCore, 128 MiB physical VMEM.
    return {"budget": 20 << 20, "vmem_cap": 64 << 20, "multi_tc": False}


# ---------------------------------------------------------------------------
# Kernels
# ---------------------------------------------------------------------------
def _kron_kernel(x_ref, kt_ref, o_ref):
    # x_ref: (tn, h*w), kt_ref: (h*w, H*W) — ONE lane-dense MXU matmul per grid step.
    o_ref[...] = jnp.dot(x_ref[...], kt_ref[...],
                         preferred_element_type=jnp.float32).astype(o_ref.dtype)


def _sep_kernel(x_ref, awt_ref, ah_ref, o_ref, *, tn, h):
    # x_ref: (tn*h, w), awt_ref: (w, W), ah_ref: (H, h), o_ref: (tn, H, W)
    H, W = o_ref.shape[1], o_ref.shape[2]
    # Width upsample: one big 2-D MXU matmul with the tn-slice batch folded into the M dim.
    t2 = jnp.dot(x_ref[...], awt_ref[...], preferred_element_type=jnp.float32)   # (tn*h, W)
    t = t2.reshape(tn, h, W)
    # Height upsample: a single batched contraction (no Python unroll, bounded live ranges).
    ah = ah_ref[...].astype(jnp.float32)
    ah_b = jnp.broadcast_to(ah[None], (tn, H, h))
    y = lax.dot_general(ah_b, t, (((2,), (1,)), ((0,), (0,))),
                        preferred_element_type=jnp.float32)                      # (tn, H, W)
    o_ref[...] = y.astype(o_ref.dtype)


# ---------------------------------------------------------------------------
# Wrapper
# ---------------------------------------------------------------------------
def upsample(x: jax.Array, H: int, W: int) -> jax.Array:
    """Pallas equivalent of UpSample(H, W).forward(x): NCHW (B,C,H//2,W//2) -> (B,C,H,W)."""
    B, C, h, w = x.shape
    assert h == H // 2 and w == W // 2, "input spatial dims must be (H//2, W//2)"
    KH, KW = 2 + H % 2, 2 + W % 2
    even = (KH == 2) and (KW == 2)
    N = B * C
    hw, HW = h * w, H * W
    itemsize = int(jnp.dtype(x.dtype).itemsize)
    cfg = _chip_config()

    # Normalization folded into the 0/1 matrices (rows scaled by 1/rowsum); identity when even.
    ah_np = _up_matrix(h, KH)
    aw_np = _up_matrix(w, KW)
    ah_s = (ah_np / ah_np.sum(1, keepdims=True)).astype(np.float32)   # (H, h)
    aw_s = (aw_np / aw_np.sum(1, keepdims=True)).astype(np.float32)   # (W, w)
    const_dtype = jnp.bfloat16 if (even and x.dtype == jnp.bfloat16) else jnp.float32
    c_item = int(jnp.dtype(const_dtype).itemsize)
    c_sub = 8 * max(1, 4 // c_item)
    x_sub = 8 * max(1, 4 // itemsize)

    kron_bytes = _round_up(hw, c_sub) * _round_up(HW, 128) * c_item
    use_kron = kron_bytes <= (4 << 20)

    # ---- per-slice VMEM footprint (tile-padding aware) and tn alignment ----
    if use_kron:
        fixed = kron_bytes
        per_tn = (2 * (_round_up(hw, 128) + _round_up(HW, 128)) * itemsize   # dbl-buffered in+out
                  + _round_up(HW, 128) * 4)                                  # f32 matmul result
        align = x_sub
    else:
        Wp = _round_up(W, 128)
        fixed = (_round_up(H, c_sub) * _round_up(h, 128) * c_item
                 + _round_up(w, c_sub) * Wp * c_item)
        per_tn = (2 * h * _round_up(w, 128) * itemsize          # input block (double buffered)
                  + 2 * _round_up(H, x_sub) * Wp * itemsize     # output block (double buffered)
                  + 2 * h * Wp * 4                              # t2 + possible reshape relayout
                  + _round_up(H, 8) * Wp * 4                    # f32 height-matmul result
                  + _round_up(H, 8) * _round_up(h, 128) * 4)    # broadcast A_h
        align = x_sub // math.gcd(h, x_sub)                     # keep (tn*h) sublane-aligned

    tn = max(1, (cfg["budget"] - fixed) // per_tn)
    if cfg["multi_tc"] and N >= 2 * align:
        tn = min(tn, max(align, (N // 2 // align) * align))     # >=2 grid steps feeds both TCs
    if tn >= N:
        tn = N                                                  # full dim: always tile-legal
    else:
        tn = min(N, max(align, (tn // align) * align))
    grid = pl.cdiv(N, tn)                                       # ragged tail handled by Pallas

    total = fixed + tn * per_tn
    comp_kwargs = dict(dimension_semantics=("parallel",))
    if total + (2 << 20) > (14 << 20):
        comp_kwargs["vmem_limit_bytes"] = int(min(cfg["vmem_cap"], total + (4 << 20)))
    cparams = pltpu.CompilerParams(**comp_kwargs)

    if use_kron:
        kt = jnp.asarray(np.kron(ah_s, aw_s).T, dtype=const_dtype)      # (h*w, H*W)
        x_flat = x.reshape(N, hw)                                       # free row-major reshape
        cost = pl.CostEstimate(flops=int(2 * N * hw * HW), transcendentals=0,
                               bytes_accessed=int(itemsize * N * (hw + HW) + kron_bytes))
        out = pl.pallas_call(
            _kron_kernel,
            out_shape=jax.ShapeDtypeStruct((N, HW), x.dtype),
            grid=(grid,),
            in_specs=[pl.BlockSpec((tn, hw), lambda i: (i, 0)),
                      pl.BlockSpec((hw, HW), lambda i: (0, 0))],        # resident constant
            out_specs=pl.BlockSpec((tn, HW), lambda i: (i, 0)),         # lane-dense output
            compiler_params=cparams,
            cost_estimate=cost,
        )(x_flat, kt)
        return out.reshape(B, C, H, W)

    ah_c = jnp.asarray(ah_s, dtype=const_dtype)        # (H, h)
    awt_c = jnp.asarray(aw_s.T, dtype=const_dtype)     # (w, W)
    x2 = x.reshape(N * h, w)                           # free row-major reshape
    kernel = functools.partial(_sep_kernel, tn=tn, h=h)
    cost = pl.CostEstimate(flops=int(2 * N * (h * w * W + h * H * W)), transcendentals=0,
                           bytes_accessed=int(itemsize * N * (hw + HW) + fixed))
    out = pl.pallas_call(
        kernel,
        out_shape=jax.ShapeDtypeStruct((N, H, W), x.dtype),
        grid=(grid,),
        in_specs=[pl.BlockSpec((tn * h, w), lambda i: (i, 0)),
                  pl.BlockSpec((w, W), lambda i: (0, 0)),               # resident constants
                  pl.BlockSpec((H, h), lambda i: (0, 0))],
        out_specs=pl.BlockSpec((tn, H, W), lambda i: (i, 0, 0)),
        compiler_params=cparams,
        cost_estimate=cost,
    )(x2, awt_c, ah_c)
    return out.reshape(B, C, H, W)


# ---------------------------------------------------------------------------
# Pure-JAX reference (mirrors torch.nn.functional.conv_transpose2d semantics)
# ---------------------------------------------------------------------------
def _reference(x: jax.Array, H: int, W: int) -> jax.Array:
    B, C, h, w = x.shape
    KH, KW = 2 + H % 2, 2 + W % 2
    k = jnp.ones((1, 1, KH, KW), jnp.float32)

    def ct(inp):
        return jax.lax.conv_general_dilated(
            inp, k, window_strides=(1, 1),
            padding=((KH - 1, KH - 1), (KW - 1, KW - 1)),
            lhs_dilation=(2, 2),
            dimension_numbers=("NCHW", "OIHW", "NCHW"))

    num = ct(x.reshape(B * C, 1, h, w)).reshape(B, C, H, W)
    div = ct(jnp.ones((1, 1, h, w), jnp.float32))
    return num / div


if __name__ == "__main__":
    key = jax.random.PRNGKey(0)
    B, C = 2, 4
    cases = [(16, 16, jnp.float32),    # even, Kronecker path (div == 1)
             (13, 11, jnp.float32),    # odd, Kronecker path, folded normalization
             (30, 256, jnp.float32),   # wide, separable path (lane-dense W)
             (29, 256, jnp.float32),   # odd-H, separable path, non-8-aligned h
             (16, 16, jnp.bfloat16)]   # bf16 MXU path (Kronecker)
    for (H, W, dt) in cases:
        key, sub = jax.random.split(key)
        x = jax.random.normal(sub, (B, C, H // 2, W // 2), dtype=jnp.float32).astype(dt)
        y = jax.block_until_ready(upsample(x, H, W))
        assert y.shape == (B, C, H, W) and y.dtype == x.dtype
        y_ref = _reference(x.astype(jnp.float32), H, W)
        tol = 1e-5 if dt == jnp.float32 else 5e-2
        np.testing.assert_allclose(np.asarray(y, dtype=np.float32), np.asarray(y_ref),
                                   rtol=tol, atol=tol)
    print("KERNEL_OK")
</pallas_src>

<mosaic_0001>
module attributes {stable_mosaic.version = 11 : i64} {
  func.func @_kron_kernel(%arg0: i32, %arg1: memref<8x64xf32, #tpu.memory_space<vmem>>, %arg2: memref<64x256xf32, #tpu.memory_space<vmem>>, %arg3: memref<8x256xf32, #tpu.memory_space<vmem>>) attributes {dimension_semantics = [#tpu.dimension_semantics<parallel>], iteration_bounds = array<i64: 1>, scalar_prefetch = 0 : i64, scratch_operands = 0 : i64, tpu.core_type = #tpu.core_type<tc>, window_params = [{transform_indices = @transform_0, window_bounds = array<i64: 8, 64>}, {pipeline_mode = #tpu.pipeline_mode<synchronous>, transform_indices = @transform_1, window_bounds = array<i64: 64, 256>}, {transform_indices = @transform_2, window_bounds = array<i64: 8, 256>}]} {
    %c0 = arith.constant 0 : index
    %c0_0 = arith.constant 0 : index
    %0 = vector.load %arg1[%c0, %c0_0] : memref<8x64xf32, #tpu.memory_space<vmem>>, vector<8x64xf32>
    %c0_1 = arith.constant 0 : index
    %c0_2 = arith.constant 0 : index
    %1 = vector.load %arg2[%c0_1, %c0_2] : memref<64x256xf32, #tpu.memory_space<vmem>>, vector<64x256xf32>
    %cst = arith.constant dense<0.000000e+00> : vector<8x256xf32>
    %2 = tpu.matmul %0, %1, %cst {dimension_numbers = #tpu.dot_dimension_numbers<[1], [0], [0], [1], [0, 0, 1, 1], [], []>} : vector<8x64xf32>, vector<64x256xf32>, vector<8x256xf32> -> vector<8x256xf32>
    %c0_3 = arith.constant 0 : index
    %c0_4 = arith.constant 0 : index
    %3 = vector.load %arg3[%c0_3, %c0_4] : memref<8x256xf32, #tpu.memory_space<vmem>>, vector<8x256xf32>
    tpu.vector_store %arg3[%c0_3, %c0_4], %2 {strides = array<i32>} : memref<8x256xf32, #tpu.memory_space<vmem>>, vector<8x256xf32>,
    return
  }
  func.func @transform_0(%arg0: i32) -> (i32, i32) {
    %c0_i32 = arith.constant 0 : i32
    %c0_i32_0 = arith.constant 0 : i32
    return %arg0, %c0_i32 : i32, i32
  }
  func.func @transform_1(%arg0: i32) -> (i32, i32) {
    %c0_i32 = arith.constant 0 : i32
    %c0_i32_0 = arith.constant 0 : i32
    %c0_i32_1 = arith.constant 0 : i32
    return %c0_i32, %c0_i32_0 : i32, i32
  }
  func.func @transform_2(%arg0: i32) -> (i32, i32) {
    %c0_i32 = arith.constant 0 : i32
    %c0_i32_0 = arith.constant 0 : i32
    return %arg0, %c0_i32 : i32, i32
  }
}

</mosaic_0001>

<llo_original>
// kernel: tpu_custom_call.1
$region0: #{tpu_custom_call.1}
  #allocation0 [shape = 'u32[]', space=smem, size = 0x4, offset = 0x4, fixed_abs, tag = 'smem constant byte address 0x4 - core index']
  #allocation1 [shape = 'u32[144,128]{1,0:T(1,128)}', space=vmem, size = 0x12000, scoped, tag = 'internal scratch']
  %s0 = inlined_call_operand.hbm [shape: f32[8,64], index: 0, kind: input, shape index: {}]
  %s1 = inlined_call_operand.hbm [shape: f32[64,256], index: 1, kind: input, shape index: {}]
  %s2 = inlined_call_operand.hbm [shape: f32[8,256], index: 2, kind: output, shape index: {}]
  %s3 = sld [smem:[#allocation0]]
  $region26: #{tpu_custom_call.1} parent=0
    _
  %s5 = ssub.s32 1, %s3
  %s6 = scalar_select 0, %s5, %s3
  $region1: #{tpu_custom_call.1} parent=0
    #allocation2 [shape = 'u8[4096]{0}', space=vmem, size = 0x1000, scoped, tag = 'input window, operand 0, single buffered']
    #allocation3 [shape = 's32[1]{0}', space=sflag, size = 0x4, scoped, tag = 'scoped memory for tpu_custom_call.1']
    #allocation4 [shape = 's32[1]{0}', space=sflag, size = 0x4, scoped, tag = 'scoped memory for tpu_custom_call.1']
    #allocation5 [shape = 'u8[65536]{0}', space=vmem, size = 0x10000, scoped, tag = 'input window, operand 1, single buffered']
    #allocation6 [shape = 's32[1]{0}', space=sflag, size = 0x4, scoped, tag = 'scoped memory for tpu_custom_call.1']
    #allocation7 [shape = 'u8[8192]{0}', space=vmem, size = 0x2000, scoped, tag = 'output window, operand 0, single buffered']
    %7 = vsyncpa [#allocation3], 0
    %8 = vsyncpa [#allocation6], 0
    %9 = vsyncpa [#allocation4], 0
    // Predicated region
    $region2: #{tpu_custom_call.1} parent=1 // pred_check
      _
    $region3: #{tpu_custom_call.1} parent=1 // pred_check_branch
      %11 = sbr.rel (0) target = $region5
    $region4: #{tpu_custom_call.1} parent=1 // pred_region
      %s13 = ssub.s32 128, 128
      %14 = vsyncadd [#allocation3], %s13
      %s16 = sshll.u32 [#allocation2], 4
      %s17 = int_to_ptr.vmem [resolvable:$true] %s16
      %19 = dma.hbm_to_vmem [thread:$0]  %s0, 128, %s17, [#allocation3]
    $region5: #{tpu_custom_call.1} parent=1 // pred_fallthru
      _
    // Predicated region
    $region6: #{tpu_custom_call.1} parent=1 // pred_check
      _
    $region7: #{tpu_custom_call.1} parent=1 // pred_check_branch
      %21 = sbr.rel (0) target = $region9
    $region8: #{tpu_custom_call.1} parent=1 // pred_region
      %s23 = ssub.s32 2048, 2048
      %24 = vsyncadd [#allocation6], %s23
      %s25 = sshll.u32 [#allocation5], 4
      %s26 = int_to_ptr.vmem [resolvable:$true] %s25
      %31 = dma.hbm_to_vmem [thread:$0]  %s1, 2048, %s26, [#allocation6], 256, 256, 16
    $region9: #{tpu_custom_call.1} parent=1 // pred_fallthru
      _
    // Predicated region
    $region10: #{tpu_custom_call.1} parent=1 // pred_check
      _
    $region11: #{tpu_custom_call.1} parent=1 // pred_check_branch
      %33 = sbr.rel (0) target = $region13
    $region12: #{tpu_custom_call.1} parent=1 // pred_region
      %34 = dma.done [#allocation3], 128
    $region13: #{tpu_custom_call.1} parent=1 // pred_fallthru
      _
    // Predicated region
    $region14: #{tpu_custom_call.1} parent=1 // pred_check
      _
    $region15: #{tpu_custom_call.1} parent=1 // pred_check_branch
      %36 = sbr.rel (0) target = $region17
    $region16: #{tpu_custom_call.1} parent=1 // pred_region
      %37 = dma.done [#allocation6], 2048
    $region17: #{tpu_custom_call.1} parent=1 // pred_fallthru
      _
    %v38 = vld [vmem:[#allocation2] sm:$0xff]
    %v39 = vld [vmem:[#allocation5] sm:$0xff]
    %v40 = vld [vmem:[#allocation5 + $0x8] sm:$0xff]
    %v41 = vld [vmem:[#allocation5 + $0x10] sm:$0xff]
    %v42 = vld [vmem:[#allocation5 + $0x18] sm:$0xff]
    %v43 = vld [vmem:[#allocation5 + $0x20] sm:$0xff]
    %v44 = vld [vmem:[#allocation5 + $0x28] sm:$0xff]
    %v45 = vld [vmem:[#allocation5 + $0x30] sm:$0xff]
    %v46 = vld [vmem:[#allocation5 + $0x38] sm:$0xff]
    %v47 = vld [vmem:[#allocation5 + $0x40] sm:$0xff]
    %v48 = vld [vmem:[#allocation5 + $0x48] sm:$0xff]
    %v49 = vld [vmem:[#allocation5 + $0x50] sm:$0xff]
    %v50 = vld [vmem:[#allocation5 + $0x58] sm:$0xff]
    %v51 = vld [vmem:[#allocation5 + $0x60] sm:$0xff]
    %v52 = vld [vmem:[#allocation5 + $0x68] sm:$0xff]
    %v53 = vld [vmem:[#allocation5 + $0x70] sm:$0xff]
    %v54 = vld [vmem:[#allocation5 + $0x78] sm:$0xff]
    %vm55 = vcmask 523264
    %v57 = vsel %vm55, %v38, 0
    %59 = vmatprep.subr.mxu0 %v40
    %60 = vmatpush1.msra.mxu0 %v39
    %61 = vmatprep.subr.mxu0 %v42
    %62 = vmatpush1.msra.mxu0 %v41
    %63 = vmatprep.subr.mxu0 %v44
    %64 = vmatpush1.msra.mxu0 %v43
    %65 = vmatprep.subr.mxu0 %v46
    %66 = vmatpush1.msra.mxu0 %v45
    %67 = vmatprep.subr.mxu0 %v48
    %68 = vmatpush1.msra.mxu0 %v47
    %69 = vmatprep.subr.mxu0 %v50
    %70 = vmatpush1.msra.mxu0 %v49
    %71 = vmatprep.subr.mxu0 %v52
    %72 = vmatpush1.msra.mxu0 %v51
    %73 = vmatprep.subr.mxu0 %v54
    %74 = vmatpush1.msra.mxu0 %v53
    %75 = vmatprep.subr.mxu0 0.0
    %76 = vmatpush1.msra.mxu0 0.0
    %77 = vmatprep.subr.mxu0 0.0
    %78 = vmatpush1.msra.mxu0 0.0
    %79 = vmatprep.subr.mxu0 0.0
    %80 = vmatpush1.msra.mxu0 0.0
    %81 = vmatprep.subr.mxu0 0.0
    %82 = vmatpush1.msra.mxu0 0.0
    %83 = vmatprep.subr.mxu0 0.0
    %84 = vmatpush1.msra.mxu0 0.0
    %85 = vmatprep.subr.mxu0 0.0
    %86 = vmatpush1.msra.mxu0 0.0
    %87 = vmatprep.subr.mxu0 0.0
    %88 = vmatpush1.msra.mxu0 0.0
    %89 = vmatprep.subr.mxu0 0.0
    %90 = vmatpush1.msra.mxu0 0.0
    %91 = vmatprep.subr.mxu0 0.0
    %92 = vmatpush1.msra.mxu0 0.0
    %93 = vmatprep.subr.mxu0 0.0
    %94 = vmatpush1.msra.mxu0 0.0
    %95 = vmatprep.subr.mxu0 0.0
    %96 = vmatpush1.msra.mxu0 0.0
    %97 = vmatprep.subr.mxu0 0.0
    %98 = vmatpush1.msra.mxu0 0.0
    %99 = vmatprep.subr.mxu0 0.0
    %100 = vmatpush1.msra.mxu0 0.0
    %101 = vmatprep.subr.mxu0 0.0
    %102 = vmatpush1.msra.mxu0 0.0
    %103 = vmatprep.subr.mxu0 0.0
    %104 = vmatpush1.msra.mxu0 0.0
    %105 = vmatprep.subr.mxu0 0.0
    %106 = vmatpush1.msra.mxu0 0.0
    %107 = vmatprep.subr.mxu0 0.0
    %108 = vmatpush1.msra.mxu0 0.0
    %109 = vmatprep.subr.mxu0 0.0
    %110 = vmatpush1.msra.mxu0 0.0
    %111 = vmatprep.subr.mxu0 0.0
    %112 = vmatpush1.msra.mxu0 0.0
    %113 = vmatprep.subr.mxu0 0.0
    %114 = vmatpush1.msra.mxu0 0.0
    %115 = vmatprep.subr.mxu0 0.0
    %116 = vmatpush1.msra.mxu0 0.0
    %117 = vmatprep.subr.mxu0 0.0
    %118 = vmatpush1.msra.mxu0 0.0
    %119 = vmatprep.subr.mxu0 0.0
    %120 = vmatpush1.msra.mxu0 0.0
    %121 = vmatprep.subr.mxu0 0.0
    %122 = vmatpush1.msra.mxu0 0.0
    %123 = vmatprep.mubr.f32.mxu0 0.0
    %124 = vmatmul.mubr.f32.gmra.mrb[0].mxu0 %v57
    %v125 = vpop.f32.mrb[0].mxu0
    %v126 = vadd.f32 0.0, %v125
    %v127 = vpop.f32.mrb[0].mxu0
    %v128 = vadd.f32 0.0, %v127
    %129 = vdwg.mxu0
    %130 = vst [vmem:[#allocation7] sm:$0xff] %v126
    %131 = vst [vmem:[#allocation7 + $0x8] sm:$0xff] %v128
    // Predicated region
    $region18: #{tpu_custom_call.1} parent=1 // pred_check
      _
    $region19: #{tpu_custom_call.1} parent=1 // pred_check_branch
      %133 = sbr.rel (0) target = $region21
    $region20: #{tpu_custom_call.1} parent=1 // pred_region
      %s135 = ssub.s32 256, 256
      %136 = vsyncadd [#allocation4], %s135
      %s138 = sshll.u32 [#allocation7], 4
      %s139 = int_to_ptr.vmem [resolvable:$true] %s138
      %141 = dma.vmem_to_hbm [thread:$0]  %s139, 256, %s2, [#allocation4]
    $region21: #{tpu_custom_call.1} parent=1 // pred_fallthru
      _
    // Predicated region
    $region22: #{tpu_custom_call.1} parent=1 // pred_check
      _
    $region23: #{tpu_custom_call.1} parent=1 // pred_check_branch
      %143 = sbr.rel (0) target = $region25
    $region24: #{tpu_custom_call.1} parent=1 // pred_region
      %144 = dma.done [#allocation4], 256
    $region25: #{tpu_custom_call.1} parent=1 // pred_fallthru
      _
    %145 = vsyncpa [#allocation3], 1
    %146 = vsyncpa [#allocation6], 1
    %147 = vsyncpa [#allocation4], 1

</llo_original>
